<compile_context>
chip_gen: v6e
topology: v6e:2x2x1
jax: 0.10.0
libtpu: 0.0.40
codegen_flags: <defaults>
</compile_context>

<pallas_src>
import jax
import jax.numpy as jnp
from jax.experimental import pallas as pl
from jax.experimental.pallas import tpu as pltpu


def _round_up(x, m):
    return (x + m - 1) // m * m


# ----------------------------------------------------------------------------
# Hot kernel: per-tile row lookup of the logit table via one-hot matmul.
# ----------------------------------------------------------------------------
def _lookup_kernel(ids_ref, m_ref, out_ref):
    # ids_ref : [TILE_N, 1]      int32   token ids for this tile
    # m_ref   : [OP, n_ops]      f32     row-padded logit table (resident)
    # out_ref : [TILE_N, n_ops]  f32
    ids = ids_ref[...]                                         # [TILE_N, 1]
    tile_n = ids.shape[0]
    op = m_ref.shape[0]                                        # padded K dim
    col = jax.lax.broadcasted_iota(jnp.int32, (tile_n, op), 1)
    one_hot = (ids == col).astype(jnp.float32)                 # [TILE_N, OP]
    out_ref[...] = jnp.dot(one_hot, m_ref[...],
                           preferred_element_type=jnp.float32)


def classifier_forward(x, emb_table, fc_w, fc_b, *,
                       tile_n=2048, min_pallas_tokens=2048, use_pallas=None):
    """x: [B, S] int32 indices -> logits [B, S, n_ops] float32."""
    B, S = x.shape
    N = B * S
    n_ops, emb_dim = emb_table.shape

    # Logit lookup table M = E @ W^T + b  (tiny; plain XLA, no Pallas launch).
    m = (emb_table.astype(jnp.float32) @ fc_w.astype(jnp.float32).T
         + fc_b.astype(jnp.float32))                           # [n_ops, n_ops]

    if use_pallas is None:
        use_pallas = N >= min_pallas_tokens
    if not use_pallas:
        # Small-N fast path: Pallas launch overhead would dominate.
        flat = jnp.take(m, x.reshape(N).astype(jnp.int32), axis=0)
        return flat.reshape(B, S, n_ops)

    # --- Pallas path -------------------------------------------------------
    # Pad the contraction (vocab/row) dim of M up to 128 for clean MXU K.
    OP = _round_up(max(n_ops, 128), 128)
    m_p = jnp.zeros((OP, n_ops), jnp.float32).at[:n_ops, :].set(m)

    # Token tile: big (default 2048) to amortize per-grid-step overhead, but
    # capped so the grid has >= 2 steps (keeps both v7x TensorCores busy).
    tn = max(8, min(tile_n, _round_up(pl.cdiv(N, 2), 8)))
    N_pad = _round_up(N, tn)
    ids = (jnp.zeros((N_pad, 1), jnp.int32)
           .at[:N, 0].set(x.reshape(N).astype(jnp.int32)))

    out = pl.pallas_call(
        _lookup_kernel,
        out_shape=jax.ShapeDtypeStruct((N_pad, n_ops), jnp.float32),
        grid=(N_pad // tn,),
        in_specs=[
            pl.BlockSpec((tn, 1), lambda i: (i, 0)),       # ids tile (pipelined)
            pl.BlockSpec((OP, n_ops), lambda i: (0, 0)),   # table resident
        ],
        out_specs=pl.BlockSpec((tn, n_ops), lambda i: (i, 0)),
        compiler_params=pltpu.CompilerParams(
            dimension_semantics=("parallel",),
            vmem_limit_bytes=32 * 1024 * 1024,
        ),
    )(ids, m_p)

    if N_pad != N:
        out = out[:N]
    return out.reshape(B, S, n_ops)


def reference_forward(x, emb_table, fc_w, fc_b):
    """Pure-JAX reference matching the PyTorch module semantics."""
    e = jnp.take(emb_table, x, axis=0)                    # [B, S, emb_dim]
    return jnp.einsum("bsd,od->bso", e, fc_w) + fc_b      # [B, S, n_ops]


if __name__ == "__main__":
    # Deterministic setup consistent with Classifier(n_ops, emb_dim=16).
    n_ops = 32
    emb_dim = 16

    key = jax.random.PRNGKey(0)
    k_emb, k_w, k_b, k_x1, k_x2 = jax.random.split(key, 5)

    emb_table = jax.random.normal(k_emb, (n_ops, emb_dim), dtype=jnp.float32)
    bound = 1.0 / jnp.sqrt(jnp.float32(emb_dim))
    fc_w = jax.random.uniform(k_w, (n_ops, emb_dim), jnp.float32, -bound, bound)
    fc_b = jax.random.uniform(k_b, (n_ops,), jnp.float32, -bound, bound)

    # Case 1: tiny shape (B=2, S=8) — force the Pallas path so the kernel runs.
    x_small = jax.random.randint(k_x1, (2, 8), 0, n_ops, dtype=jnp.int32)
    out_small = jax.block_until_ready(
        classifier_forward(x_small, emb_table, fc_w, fc_b, use_pallas=True))
    ref_small = reference_forward(x_small, emb_table, fc_w, fc_b)
    assert out_small.shape == (2, 8, n_ops)
    assert jnp.allclose(out_small, ref_small, atol=1e-5, rtol=1e-5), \
        "Pallas path mismatch vs reference (small)"

    # Same tiny shape through the auto (XLA fast-path) route.
    out_fast = jax.block_until_ready(
        classifier_forward(x_small, emb_table, fc_w, fc_b))
    assert jnp.allclose(out_fast, ref_small, atol=1e-5, rtol=1e-5), \
        "XLA fast path mismatch vs reference"

    # Case 2: moderate shape — auto-selects the Pallas path (tn=2048, 2 steps).
    x_big = jax.random.randint(k_x2, (4, 1024), 0, n_ops, dtype=jnp.int32)
    out_big = jax.block_until_ready(
        classifier_forward(x_big, emb_table, fc_w, fc_b))
    ref_big = reference_forward(x_big, emb_table, fc_w, fc_b)
    assert out_big.shape == (4, 1024, n_ops)
    assert jnp.allclose(out_big, ref_big, atol=1e-5, rtol=1e-5), \
        "Pallas path mismatch vs reference (large)"

    print("KERNEL_OK")
</pallas_src>

<mosaic_0001>
module attributes {stable_mosaic.version = 11 : i64} {
  func.func @_lookup_kernel(%arg0: i32, %arg1: memref<8x1xi32, #tpu.memory_space<vmem>>, %arg2: memref<128x32xf32, #tpu.memory_space<vmem>>, %arg3: memref<8x32xf32, #tpu.memory_space<vmem>>) attributes {dimension_semantics = [#tpu.dimension_semantics<parallel>], iteration_bounds = array<i64: 2>, scalar_prefetch = 0 : i64, scratch_operands = 0 : i64, tpu.core_type = #tpu.core_type<tc>, window_params = [{transform_indices = @transform_0, window_bounds = array<i64: 8, 1>}, {pipeline_mode = #tpu.pipeline_mode<synchronous>, transform_indices = @transform_1, window_bounds = array<i64: 128, 32>}, {transform_indices = @transform_2, window_bounds = array<i64: 8, 32>}]} {
    %c0 = arith.constant 0 : index
    %c0_0 = arith.constant 0 : index
    %0 = vector.load %arg1[%c0, %c0_0] : memref<8x1xi32, #tpu.memory_space<vmem>>, vector<8x1xi32>
    %1 = tpu.iota {dimensions = array<i32: 1>} : vector<8x128xi32>
    %2 = vector.broadcast %0 : vector<8x1xi32> to vector<8x128xi32>
    %3 = arith.cmpi eq, %2, %1 : vector<8x128xi32>
    %4 = arith.extui %3 : vector<8x128xi1> to vector<8x128xi32>
    %5 = arith.sitofp %4 : vector<8x128xi32> to vector<8x128xf32>
    %c0_1 = arith.constant 0 : index
    %c0_2 = arith.constant 0 : index
    %6 = vector.load %arg2[%c0_1, %c0_2] : memref<128x32xf32, #tpu.memory_space<vmem>>, vector<128x32xf32>
    %cst = arith.constant dense<0.000000e+00> : vector<8x32xf32>
    %7 = tpu.matmul %5, %6, %cst {dimension_numbers = #tpu.dot_dimension_numbers<[1], [0], [0], [1], [0, 0, 1, 1], [], []>} : vector<8x128xf32>, vector<128x32xf32>, vector<8x32xf32> -> vector<8x32xf32>
    %c0_3 = arith.constant 0 : index
    %c0_4 = arith.constant 0 : index
    %8 = vector.load %arg3[%c0_3, %c0_4] : memref<8x32xf32, #tpu.memory_space<vmem>>, vector<8x32xf32>
    tpu.vector_store %arg3[%c0_3, %c0_4], %7 {strides = array<i32>} : memref<8x32xf32, #tpu.memory_space<vmem>>, vector<8x32xf32>,
    return
  }
  func.func @transform_0(%arg0: i32) -> (i32, i32) {
    %c0_i32 = arith.constant 0 : i32
    %c0_i32_0 = arith.constant 0 : i32
    return %arg0, %c0_i32 : i32, i32
  }
  func.func @transform_1(%arg0: i32) -> (i32, i32) {
    %c0_i32 = arith.constant 0 : i32
    %c0_i32_0 = arith.constant 0 : i32
    %c0_i32_1 = arith.constant 0 : i32
    return %c0_i32, %c0_i32_0 : i32, i32
  }
  func.func @transform_2(%arg0: i32) -> (i32, i32) {
    %c0_i32 = arith.constant 0 : i32
    %c0_i32_0 = arith.constant 0 : i32
    return %arg0, %c0_i32 : i32, i32
  }
}

</mosaic_0001>

<llo_original>
// kernel: tpu_custom_call.1
$region0: #{tpu_custom_call.1}
  #allocation0 [shape = 'u32[]', space=smem, size = 0x4, offset = 0x4, fixed_abs, tag = 'smem constant byte address 0x4 - core index']
  #allocation1 [shape = 'u32[144,128]{1,0:T(1,128)}', space=vmem, size = 0x12000, scoped, tag = 'internal scratch']
  %s0 = inlined_call_operand.vmem [shape: s32[16,1], index: 0, kind: input, shape index: {}]
  %s1 = inlined_call_operand.vmem [shape: f32[128,32], index: 1, kind: input, shape index: {}]
  %s2 = inlined_call_operand.hbm [shape: f32[16,32], index: 2, kind: output, shape index: {}]
  %s3 = sld [smem:[#allocation0]]
  $region41: #{tpu_custom_call.1} parent=0
    _
  %s5 = ssub.s32 1, %s3
  %s6 = scalar_select 0, %s5, %s3
  $region1: #{tpu_custom_call.1} parent=0
    #allocation2 [shape = 'u8[8192]{0}', space=vmem, size = 0x2000, scoped, tag = 'output window, operand 0']
    #allocation3 [shape = 's32[2]{0}', space=sflag, size = 0x8, scoped, tag = 'scoped memory for tpu_custom_call.1']
    %7 = vsyncpa [#allocation3], 0
    %s8 = scalar_lea.sflag [#allocation3], 1
    %9 = vsyncpa %s8, 0
    loop: start=0, step=1, limit=4
    $region2: #{tpu_custom_call.1} parent=1 // loop_pre_header
      _
    $region3: #{tpu_custom_call.1} parent=1 // loop_header
      %s11 = sphi 0, %s15
      %p12 = scmp.ge.s32.totalorder %s11, 4
      %s21 = sphi 0, %s23
      %s24 = sphi 0, %s21
      %s25 = sphi 0, %s24
      %s41 = sphi 0, %s25
      %s45 = sphi 0, %s45
      %s47 = sphi 0, %s45
      %s48 = sphi 0, %s47
      %s62 = sphi 0, %s48
      %s68 = sphi 0, %s70
      %s71 = sphi 0, %s68
      %s72 = sphi 0, %s71
      %s88 = sphi 0, %s72
    $region4: #{tpu_custom_call.1} parent=1 // loop_header_branch
      %14 = sbr.rel (%p12) target = $region8
    $region5: #{tpu_custom_call.1} parent=1 // loop_body
      %s16 = ssub.s32 %s11, 1
      %s17 = ssub.s32 %s11, 2
      %s18 = sadd.s32 %s11, 1
      %s19 = ssub.s32 %s11, %s18
      %p20 = scmp.eq.s32.totalorder %s19, 0
      %s22 = sadd.s32 %s21, 1
      %s23 = scalar_select %p20, %s21, %s22
      %p26 = pneg %p20
      %p27 = scmp.eq.s32.totalorder %s11, 1
      %p28 = por %p26, %p27
      %p29 = scmp.ne.s32.totalorder %s21, %s24
      %p30 = scmp.eq.s32.totalorder %s11, 0
      %p31 = por %p29, %p30
      %p32 = scmp.ne.s32.totalorder %s21, %s24
      %p33 = scmp.eq.s32.totalorder %s16, 1
      %p34 = por %p32, %p33
      %p35 = scmp.ne.s32.totalorder %s24, %s25
      %p36 = scmp.eq.s32.totalorder %s16, 0
      %p37 = por %p35, %p36
      %p38 = scmp.ne.s32.totalorder %s24, %s25
      %p39 = scmp.eq.s32.totalorder %s17, 1
      %p40 = por %p38, %p39
      %p42 = scmp.ne.s32.totalorder %s25, %s41
      %p43 = scmp.eq.s32.totalorder %s17, 0
      %p44 = por %p42, %p43
      %s46 = sadd.s32 %s45, 1
      %p49 = scmp.eq.s32.totalorder %s11, 1
      %p50 = scmp.ne.s32.totalorder %s45, %s47
      %p51 = scmp.eq.s32.totalorder %s11, 0
      %p52 = por %p50, %p51
      %p53 = scmp.ne.s32.totalorder %s45, %s47
      %p54 = scmp.eq.s32.totalorder %s16, 1
      %p55 = por %p53, %p54
      %p56 = scmp.ne.s32.totalorder %s47, %s48
      %p57 = scmp.eq.s32.totalorder %s16, 0
      %p58 = por %p56, %p57
      %p59 = scmp.ne.s32.totalorder %s47, %s48
      %p60 = scmp.eq.s32.totalorder %s17, 1
      %p61 = por %p59, %p60
      %p63 = scmp.ne.s32.totalorder %s48, %s62
      %p64 = scmp.eq.s32.totalorder %s17, 0
      %p65 = por %p63, %p64
      %s66 = ssub.s32 %s11, %s18
      %p67 = scmp.eq.s32.totalorder %s66, 0
      %s69 = sadd.s32 %s68, 1
      %s70 = scalar_select %p67, %s68, %s69
      %p73 = pneg %p67
      %p74 = scmp.eq.s32.totalorder %s11, 1
      %p75 = por %p73, %p74
      %p76 = scmp.ne.s32.totalorder %s68, %s71
      %p77 = scmp.eq.s32.totalorder %s11, 0
      %p78 = por %p76, %p77
      %p79 = scmp.ne.s32.totalorder %s68, %s71
      %p80 = scmp.eq.s32.totalorder %s16, 1
      %p81 = por %p79, %p80
      %p82 = scmp.ne.s32.totalorder %s71, %s72
      %p83 = scmp.eq.s32.totalorder %s16, 0
      %p84 = por %p82, %p83
      %p85 = scmp.ne.s32.totalorder %s71, %s72
      %p86 = scmp.eq.s32.totalorder %s17, 1
      %p87 = por %p85, %p86
      %p89 = scmp.ne.s32.totalorder %s72, %s88
      %p90 = scmp.eq.s32.totalorder %s17, 0
      %p91 = por %p89, %p90
      %p92 = scmp.le.s32.totalorder 1, %s11
      %p93 = scmp.lt.s32.totalorder %s11, 3
      %p94 = pnand %p92, %p93
      %p95 = pneg %p94
      // Predicated region
      $region9: #{tpu_custom_call.1} parent=5 // pred_check
        _
      $region10: #{tpu_custom_call.1} parent=5 // pred_check_branch
        %97 = sbr.rel (%p94) target = $region12
      $region11: #{tpu_custom_call.1} parent=5 // pred_region
        %s98 = ssub.s32 %s11, 1
        // Predicated region
        $region13: #{tpu_custom_call.1} parent=11 // pred_check
          %p99 = pneg %p58
        $region14: #{tpu_custom_call.1} parent=11 // pred_check_branch
          %101 = sbr.rel (%p99) target = $region16
        $region15: #{tpu_custom_call.1} parent=11 // pred_region
          _
        $region16: #{tpu_custom_call.1} parent=11 // pred_fallthru
          _
      $region12: #{tpu_custom_call.1} parent=5 // pred_fallthru
        _
      %p102 = scmp.lt.s32.totalorder %s11, 2
      // Predicated region
      $region17: #{tpu_custom_call.1} parent=5 // pred_check
        %p103 = pneg %p102
      $region18: #{tpu_custom_call.1} parent=5 // pred_check_branch
        %105 = sbr.rel (%p103) target = $region20
      $region19: #{tpu_custom_call.1} parent=5 // pred_region
        // Predicated region
        $region21: #{tpu_custom_call.1} parent=19 // pred_check
          %p106 = pneg %p31
        $region22: #{tpu_custom_call.1} parent=19 // pred_check_branch
          %108 = sbr.rel (%p106) target = $region24
        $region23: #{tpu_custom_call.1} parent=19 // pred_region
          %p109 = scmp.lt.s32.totalorder %s11, 1
          %s110 = scalar_select %p109, %s11, 1
          %s111 = smul.addr %s110, 8
          %s112 = scalar_lea.vmem %s0, %s111
        $region24: #{tpu_custom_call.1} parent=19 // pred_fallthru
          _
      $region20: #{tpu_custom_call.1} parent=5 // pred_fallthru
        _
      %p113 = scmp.le.s32.totalorder 1, %s11
      %p114 = scmp.lt.s32.totalorder %s11, 3
      %p115 = pnand %p113, %p114
      %p116 = pneg %p115
      // Predicated region
      $region25: #{tpu_custom_call.1} parent=5 // pred_check
        _
      $region26: #{tpu_custom_call.1} parent=5 // pred_check_branch
        %118 = sbr.rel (%p115) target = $region28
      $region27: #{tpu_custom_call.1} parent=5 // pred_region
        %s119 = ssub.s32 %s11, 1
        %p120 = scmp.lt.s32.totalorder %s16, 1
        %s121 = scalar_select %p120, %s16, 1
        %s122 = smul.addr %s121, 8
        %s123 = scalar_lea.vmem %s0, %s122
        %p124 = pneg %p37
        %p125 = pneg %p34
        %p126 = pneg %p58
        %p127 = pneg %p55
        %p128 = pneg %p84
        %p129 = pneg %p81
        %s130 = sand.u32 %s71, 1
        %s131 = scalar_lea.sflag [#allocation3], %s130
        %s132 = sand.u32 %s71, 1
        %s133 = smul.addr %s132, 8
        %s134 = scalar_lea.vmem [#allocation2], %s133
        %p135 = scmp.lt.s32.totalorder %s16, 1
        %s136 = scalar_select %p135, %s16, 1
        %s137 = smul.addr %s136, 8
        %s138 = scalar_lea.vmem %s0, %s137
        %v139 = vld [vmem:[%s138] sm:$0xff]
        %v140 = vlaneseq
        %v141 = vand.u32 %v140, 127
        %142 = vset.pattern.permute.xlu0 0
        %143 = vperm.xlu0 %142, %v139
        %v144 = vpop.permute.xlu0 %143
        %vm145 = vcmp.eq.s32.totalorder %v144, %v141
        %v146 = vsel %vm145, 1, 0
        %v147 = vcvt.s32.f32 %v146
        %v148 = vld [vmem:[%s1] sm:$0xff]
        %v149 = vld [vmem:[%s1 + $0x8] sm:$0xff]
        %v150 = vld [vmem:[%s1 + $0x10] sm:$0xff]
        %v151 = vld [vmem:[%s1 + $0x18] sm:$0xff]
        %v152 = vld [vmem:[%s1 + $0x20] sm:$0xff]
        %v153 = vld [vmem:[%s1 + $0x28] sm:$0xff]
        %v154 = vld [vmem:[%s1 + $0x30] sm:$0xff]
        %v155 = vld [vmem:[%s1 + $0x38] sm:$0xff]
        %v156 = vld [vmem:[%s1 + $0x40] sm:$0xff]
        %v157 = vld [vmem:[%s1 + $0x48] sm:$0xff]
        %v158 = vld [vmem:[%s1 + $0x50] sm:$0xff]
        %v159 = vld [vmem:[%s1 + $0x58] sm:$0xff]
        %v160 = vld [vmem:[%s1 + $0x60] sm:$0xff]
        %v161 = vld [vmem:[%s1 + $0x68] sm:$0xff]
        %v162 = vld [vmem:[%s1 + $0x70] sm:$0xff]
        %v163 = vld [vmem:[%s1 + $0x78] sm:$0xff]
        %164 = vmatprep.subr.mxu0 0.0
        %165 = vmatpush1.msra.mxu0 %v163
        %166 = vmatprep.subr.mxu0 0.0
        %167 = vmatpush1.msra.mxu0 %v162
        %168 = vmatprep.subr.mxu0 0.0
        %169 = vmatpush1.msra.mxu0 %v161
        %170 = vmatprep.subr.mxu0 0.0
        %171 = vmatpush1.msra.mxu0 %v160
        %172 = vmatprep.subr.mxu0 0.0
        %173 = vmatpush1.msra.mxu0 %v159
        %174 = vmatprep.subr.mxu0 0.0
        %175 = vmatpush1.msra.mxu0 %v158
        %176 = vmatprep.subr.mxu0 0.0
        %177 = vmatpush1.msra.mxu0 %v157
        %178 = vmatprep.subr.mxu0 0.0
        %179 = vmatpush1.msra.mxu0 %v156
        %180 = vmatprep.subr.mxu0 0.0
        %181 = vmatpush1.msra.mxu0 %v155
        %182 = vmatprep.subr.mxu0 0.0
        %183 = vmatpush1.msra.mxu0 %v154
        %184 = vmatprep.subr.mxu0 0.0
        %185 = vmatpush1.msra.mxu0 %v153
        %186 = vmatprep.subr.mxu0 0.0
        %187 = vmatpush1.msra.mxu0 %v152
        %188 = vmatprep.subr.mxu0 0.0
        %189 = vmatpush1.msra.mxu0 %v151
        %190 = vmatprep.subr.mxu0 0.0
        %191 = vmatpush1.msra.mxu0 %v150
        %192 = vmatprep.subr.mxu0 0.0
        %193 = vmatpush1.msra.mxu0 %v149
        %194 = vmatprep.subr.mxu0 0.0
        %195 = vmatpush1.msra.mxu0 %v148
        %196 = vmatprep.subr.mxu0 0.0
        %197 = vmatpush2.msra.mxu0 0.0
        %198 = vmatprep.subr.mxu0 0.0
        %199 = vmatpush2.msra.mxu0 0.0
        %200 = vmatprep.subr.mxu0 0.0
        %201 = vmatpush2.msra.mxu0 0.0
        %202 = vmatprep.subr.mxu0 0.0
        %203 = vmatpush2.msra.mxu0 0.0
        %204 = vmatprep.subr.mxu0 0.0
        %205 = vmatpush2.msra.mxu0 0.0
        %206 = vmatprep.subr.mxu0 0.0
        %207 = vmatpush2.msra.mxu0 0.0
        %208 = vmatprep.subr.mxu0 0.0
        %209 = vmatpush2.msra.mxu0 0.0
        %210 = vmatprep.subr.mxu0 0.0
        %211 = vmatpush2.msra.mxu0 0.0
        %212 = vmatprep.subr.mxu0 0.0
        %213 = vmatpush2.msra.mxu0 0.0
        %214 = vmatprep.subr.mxu0 0.0
        %215 = vmatpush2.msra.mxu0 0.0
        %216 = vmatprep.subr.mxu0 0.0
        %217 = vmatpush2.msra.mxu0 0.0
        %218 = vmatprep.subr.mxu0 0.0
        %219 = vmatpush2.msra.mxu0 0.0
        %220 = vmatprep.subr.mxu0 0.0
        %221 = vmatpush2.msra.mxu0 0.0
        %222 = vmatprep.subr.mxu0 0.0
        %223 = vmatpush2.msra.mxu0 0.0
        %224 = vmatprep.subr.mxu0 0.0
        %225 = vmatpush2.msra.mxu0 0.0
        %226 = vmatprep.subr.mxu0 0.0
        %227 = vmatpush2.msra.mxu0 0.0
        %228 = vmatprep.mubr.f32.mxu0 0.0
        %229 = vmatmul.mubr.f32.gmra.mxu0 %v147
        %v230 = vpop.f32.mrf.mxu0
        %v231 = vadd.f32 0.0, %v230
        %v232 = vpop.f32.mrf.mxu0
        %233 = vdwg.mxu0
        %vm234 = vcmask 261120
        %235 = vst.msk [vmem:[%s134] sm:$0xff] %vm234, %v231
        %s236 = sand.u32 %s71, 1
        %s237 = scalar_lea.sflag [#allocation3], %s236
        %s238 = sand.u32 %s71, 1
        %s239 = smul.addr %s238, 8
        %s240 = scalar_lea.vmem [#allocation2], %s239
        // Predicated region
        $region29: #{tpu_custom_call.1} parent=27 // pred_check
          %p241 = pneg %p81
        $region30: #{tpu_custom_call.1} parent=27 // pred_check_branch
          %243 = sbr.rel (%p241) target = $region32
        $region31: #{tpu_custom_call.1} parent=27 // pred_region
          %s245 = ssub.s32 128, 128
          %246 = vsyncadd %s237, %s245
          %s247 = smul.addr %s16, 128
          %s248 = scalar_lea.hbm %s2, %s247
          %s250 = sshll.u32 %s240, 4
          %s251 = int_to_ptr.vmem [resolvable:$true] %s250
          %253 = dma.vmem_to_hbm [thread:$0]  %s251, 128, %s248, %s237
        $region32: #{tpu_custom_call.1} parent=27 // pred_fallthru
          _
      $region28: #{tpu_custom_call.1} parent=5 // pred_fallthru
        _
      %p254 = scmp.le.s32.totalorder 2, %s11
      // Predicated region
      $region33: #{tpu_custom_call.1} parent=5 // pred_check
        %p255 = pneg %p254
      $region34: #{tpu_custom_call.1} parent=5 // pred_check_branch
        %257 = sbr.rel (%p255) target = $region36
      $region35: #{tpu_custom_call.1} parent=5 // pred_region
        %s258 = ssub.s32 %s11, 2
        // Predicated region
        $region37: #{tpu_custom_call.1} parent=35 // pred_check
          %p259 = pneg %p87
        $region38: #{tpu_custom_call.1} parent=35 // pred_check_branch
          %261 = sbr.rel (%p259) target = $region40
        $region39: #{tpu_custom_call.1} parent=35 // pred_region
          %s262 = sand.u32 %s72, 1
          %s263 = scalar_lea.sflag [#allocation3], %s262
          %s264 = sand.u32 %s72, 1
          %s265 = smul.addr %s264, 8
          %s266 = scalar_lea.vmem [#allocation2], %s265
          %267 = dma.done %s263, 128
        $region40: #{tpu_custom_call.1} parent=35 // pred_fallthru
          _
      $region36: #{tpu_custom_call.1} parent=5 // pred_fallthru
        _
    $region6: #{tpu_custom_call.1} parent=1 // loop_footer
      %s15 = sadd.s32 1, %s11
    $region7: #{tpu_custom_call.1} parent=1 // loop_footer_branch
      %10 = sbr.rel target = $region3
    $region8: #{tpu_custom_call.1} parent=1 // loop_exit
      _
    %268 = vsyncpa [#allocation3], 1
    %s269 = scalar_lea.sflag [#allocation3], 1
    %270 = vsyncpa %s269, 1

</llo_original>
